<compile_context>
chip_gen: v6e
topology: v6e:2x2x1
jax: 0.10.0
libtpu: 0.0.40
codegen_flags: <defaults>
</compile_context>

<pallas_src>
import functools

import jax
import jax.numpy as jnp
from jax.experimental import pallas as pl
from jax.experimental.pallas import tpu as pltpu


def _pos_enc_kernel(x_ref, w_ref, posb_ref, cls_ref, o_ref, *, tb, seq):
    # x_ref   : (TB*S, F)  bf16   flattened patch rows for TB batch elements
    # w_ref   : (F, D)     bf16   projection weight (pre-transposed)
    # posb_ref: (TB*S, D)  f32    (position_embeddings[1:] + bias), tiled TB times
    # cls_ref : (1, D)     f32    cls_token + position_embeddings[0]
    # o_ref   : (TB, S+1, D)      output slab for TB batch elements
    proj = jnp.dot(x_ref[...], w_ref[...], preferred_element_type=jnp.float32)
    body = proj + posb_ref[...]                       # (TB*S, D) f32
    cls_row = cls_ref[...]                            # (1, D)    f32
    for bi in range(tb):                              # static unroll over batch elements
        tile = jnp.concatenate(
            [cls_row, body[bi * seq:(bi + 1) * seq, :]], axis=0)   # (S+1, D)
        # one aligned full-slab store per batch element (no sublane-offset store)
        o_ref[bi] = tile.astype(o_ref.dtype)
    # TODO(synk): dropout is identity here (eval mode); training-mode dropout
    # would use pltpu.prng_seed + pltpu.prng_random_bits for the mask.


def position_encoding_training(x, w, b, cls_token, pos_emb, *, row_target=512):
    """x: (B, S, F); w: (F, D); b: (D,); cls_token: (D,); pos_emb: (S+1, D)."""
    B, S, F = x.shape
    D = w.shape[1]
    assert pos_emb.shape == (S + 1, D), "seq length must equal num_patches"

    # Fold batch-invariant adds once in the wrapper (removes per-element VPU adds
    # and two BlockSpecs/DMAs per grid step).
    pos_body = (pos_emb[1:, :] + b[None, :]).astype(jnp.float32)           # (S, D)
    cls_row = (cls_token[None, :] + pos_emb[0:1, :]).astype(jnp.float32)   # (1, D)

    # TB = whole batch elements per grid step: aim for ~row_target rows per
    # matmul while evenly dividing B (keeps pos tiling static per step).
    tb = min(B, max(1, row_target // S))
    while B % tb != 0:
        tb -= 1
    num_tiles = B // tb

    x_rows = x.reshape(B * S, F).astype(jnp.bfloat16)    # (B*S, F) bf16 rows
    w_bf = w.astype(jnp.bfloat16)                        # (F, D)   bf16
    pos_tile = jnp.tile(pos_body, (tb, 1))               # (TB*S, D), reused every step

    itemsize = jnp.dtype(x.dtype).itemsize
    blk_bytes = (tb * S * F * 2                 # x tile (bf16)
                 + F * D * 2                    # weight (bf16)
                 + tb * S * D * 4               # folded pos tile (f32)
                 + D * 4                        # cls row (f32)
                 + tb * (S + 1) * D * itemsize)  # output slab
    # Double-buffered blocks + headroom, sized against v7x's smaller VMEM.
    vmem_limit = int(min(128 * 1024 * 1024, max(16 * 1024 * 1024, 4 * blk_bytes)))

    kernel = functools.partial(_pos_enc_kernel, tb=tb, seq=S)
    return pl.pallas_call(
        kernel,
        out_shape=jax.ShapeDtypeStruct((B, S + 1, D), x.dtype),
        grid_spec=pltpu.PrefetchScalarGridSpec(
            num_scalar_prefetch=0,
            grid=(num_tiles,),
            in_specs=[
                pl.BlockSpec((tb * S, F), lambda i: (i, 0)),    # x rows for TB batches
                pl.BlockSpec((F, D), lambda i: (0, 0)),         # weight (resident)
                pl.BlockSpec((tb * S, D), lambda i: (0, 0)),    # pos(+bias) tile (resident)
                pl.BlockSpec((1, D), lambda i: (0, 0)),         # cls(+pos[0]) row (resident)
            ],
            out_specs=pl.BlockSpec((tb, S + 1, D), lambda i: (i, 0, 0)),
        ),
        compiler_params=pltpu.CompilerParams(
            dimension_semantics=("parallel",),
            vmem_limit_bytes=vmem_limit,
        ),
    )(x_rows, w_bf, pos_tile, cls_row)


if __name__ == "__main__":
    # Small shapes consistent with the module: batch=2, seq(num_patches)=8,
    # fea_size=20 (module default), tf_hidden_dim=128 (lane-dense; the real
    # module default 768 is also a multiple of 128).
    B, S, F, D = 2, 8, 20, 128

    key = jax.random.PRNGKey(0)
    k_x, k_w, k_b, k_p = jax.random.split(key, 4)

    x = jax.random.normal(k_x, (B, S, F), dtype=jnp.float32)

    # Parameters. PyTorch Linear stores weight as (out, in); pre-transpose to (F, D).
    w_torch = jax.random.normal(k_w, (D, F), dtype=jnp.float32) * 0.02
    w = jnp.transpose(w_torch)                                    # (F, D)
    b = jax.random.normal(k_b, (D,), dtype=jnp.float32) * 0.02
    cls_token = jnp.ones((D,), dtype=jnp.float32)                 # module init: ones
    # Module init is zeros; random values exercise the position-embedding add.
    pos_emb = jax.random.normal(k_p, (S + 1, D), dtype=jnp.float32) * 0.02

    out = jax.block_until_ready(
        position_encoding_training(x, w, b, cls_token, pos_emb))

    # Reference in plain JAX: same bf16 matmul operands, f32 accumulation.
    xb = x.astype(jnp.bfloat16).astype(jnp.float32)
    wb = w.astype(jnp.bfloat16).astype(jnp.float32)
    proj_ref = jnp.einsum("bsf,fd->bsd", xb, wb,
                          precision=jax.lax.Precision.HIGHEST) + b
    cls_bcast = jnp.broadcast_to(cls_token[None, None, :], (B, 1, D))
    ref = jnp.concatenate([cls_bcast, proj_ref], axis=1) + pos_emb[None]

    assert out.shape == (B, S + 1, D)
    assert jnp.allclose(out, ref, atol=1e-4, rtol=1e-4)

    print("KERNEL_OK")
</pallas_src>

<mosaic_0001>
module attributes {stable_mosaic.version = 11 : i64} {
  func.func @_pos_enc_kernel(%arg0: i32, %arg1: memref<16x20xbf16, #tpu.memory_space<vmem>>, %arg2: memref<20x128xbf16, #tpu.memory_space<vmem>>, %arg3: memref<16x128xf32, #tpu.memory_space<vmem>>, %arg4: memref<1x128xf32, #tpu.memory_space<vmem>>, %arg5: memref<2x9x128xf32, #tpu.memory_space<vmem>>) attributes {dimension_semantics = [#tpu.dimension_semantics<parallel>], iteration_bounds = array<i64: 1>, scalar_prefetch = 0 : i64, scratch_operands = 0 : i64, tpu.core_type = #tpu.core_type<tc>, window_params = [{transform_indices = @transform_0, window_bounds = array<i64: 16, 20>}, {pipeline_mode = #tpu.pipeline_mode<synchronous>, transform_indices = @transform_1, window_bounds = array<i64: 20, 128>}, {pipeline_mode = #tpu.pipeline_mode<synchronous>, transform_indices = @transform_2, window_bounds = array<i64: 16, 128>}, {pipeline_mode = #tpu.pipeline_mode<synchronous>, transform_indices = @transform_3, window_bounds = array<i64: 1, 128>}, {transform_indices = @transform_4, window_bounds = array<i64: 2, 9, 128>}]} {
    %c0 = arith.constant 0 : index
    %c0_0 = arith.constant 0 : index
    %0 = vector.load %arg1[%c0, %c0_0] : memref<16x20xbf16, #tpu.memory_space<vmem>>, vector<16x20xbf16>
    %c0_1 = arith.constant 0 : index
    %c0_2 = arith.constant 0 : index
    %1 = vector.load %arg2[%c0_1, %c0_2] : memref<20x128xbf16, #tpu.memory_space<vmem>>, vector<20x128xbf16>
    %cst = arith.constant dense<0.000000e+00> : vector<16x128xf32>
    %2 = tpu.matmul %0, %1, %cst {dimension_numbers = #tpu.dot_dimension_numbers<[1], [0], [0], [1], [0, 0, 1, 1], [], []>} : vector<16x20xbf16>, vector<20x128xbf16>, vector<16x128xf32> -> vector<16x128xf32>
    %c0_3 = arith.constant 0 : index
    %c0_4 = arith.constant 0 : index
    %3 = vector.load %arg3[%c0_3, %c0_4] : memref<16x128xf32, #tpu.memory_space<vmem>>, vector<16x128xf32>
    %4 = arith.addf %2, %3 : vector<16x128xf32>
    %c0_5 = arith.constant 0 : index
    %c0_6 = arith.constant 0 : index
    %5 = vector.load %arg4[%c0_5, %c0_6] : memref<1x128xf32, #tpu.memory_space<vmem>>, vector<1x128xf32>
    %6 = vector.extract_strided_slice %4 {offsets = [0, 0], sizes = [8, 128], strides = [1, 1]} : vector<16x128xf32> to vector<8x128xf32>
    %7 = tpu.concatenate %5, %6 in 0 : vector<1x128xf32>, vector<8x128xf32> -> vector<9x128xf32>
    %c0_7 = arith.constant 0 : index
    %c0_8 = arith.constant 0 : index
    %c0_9 = arith.constant 0 : index
    %8 = vector.load %arg5[%c0_7, %c0_8, %c0_9] : memref<2x9x128xf32, #tpu.memory_space<vmem>>, vector<1x9x128xf32>
    %9 = vector.shape_cast %8 : vector<1x9x128xf32> to vector<9x128xf32>
    %10 = vector.shape_cast %7 : vector<9x128xf32> to vector<1x9x128xf32>
    tpu.vector_store %arg5[%c0_7, %c0_8, %c0_9], %10 {strides = array<i32>} : memref<2x9x128xf32, #tpu.memory_space<vmem>>, vector<1x9x128xf32>,
    %11 = vector.extract_strided_slice %4 {offsets = [8, 0], sizes = [8, 128], strides = [1, 1]} : vector<16x128xf32> to vector<8x128xf32>
    %12 = tpu.concatenate %5, %11 in 0 : vector<1x128xf32>, vector<8x128xf32> -> vector<9x128xf32>
    %c1 = arith.constant 1 : index
    %c0_10 = arith.constant 0 : index
    %c0_11 = arith.constant 0 : index
    %13 = vector.load %arg5[%c1, %c0_10, %c0_11] : memref<2x9x128xf32, #tpu.memory_space<vmem>>, vector<1x9x128xf32>
    %14 = vector.shape_cast %13 : vector<1x9x128xf32> to vector<9x128xf32>
    %15 = vector.shape_cast %12 : vector<9x128xf32> to vector<1x9x128xf32>
    tpu.vector_store %arg5[%c1, %c0_10, %c0_11], %15 {strides = array<i32>} : memref<2x9x128xf32, #tpu.memory_space<vmem>>, vector<1x9x128xf32>,
    return
  }
  func.func @transform_0(%arg0: i32) -> (i32, i32) {
    %c0_i32 = arith.constant 0 : i32
    %c0_i32_0 = arith.constant 0 : i32
    return %arg0, %c0_i32 : i32, i32
  }
  func.func @transform_1(%arg0: i32) -> (i32, i32) {
    %c0_i32 = arith.constant 0 : i32
    %c0_i32_0 = arith.constant 0 : i32
    %c0_i32_1 = arith.constant 0 : i32
    return %c0_i32, %c0_i32_0 : i32, i32
  }
  func.func @transform_2(%arg0: i32) -> (i32, i32) {
    %c0_i32 = arith.constant 0 : i32
    %c0_i32_0 = arith.constant 0 : i32
    %c0_i32_1 = arith.constant 0 : i32
    return %c0_i32, %c0_i32_0 : i32, i32
  }
  func.func @transform_3(%arg0: i32) -> (i32, i32) {
    %c0_i32 = arith.constant 0 : i32
    %c0_i32_0 = arith.constant 0 : i32
    %c0_i32_1 = arith.constant 0 : i32
    return %c0_i32, %c0_i32_0 : i32, i32
  }
  func.func @transform_4(%arg0: i32) -> (i32, i32, i32) {
    %c0_i32 = arith.constant 0 : i32
    %c0_i32_0 = arith.constant 0 : i32
    %c0_i32_1 = arith.constant 0 : i32
    return %arg0, %c0_i32, %c0_i32_0 : i32, i32, i32
  }
}

</mosaic_0001>

<llo_original>
// kernel: tpu_custom_call.1
$region0: #{tpu_custom_call.1}
  #allocation0 [shape = 'u32[]', space=smem, size = 0x4, offset = 0x4, fixed_abs, tag = 'smem constant byte address 0x4 - core index']
  #allocation1 [shape = 'u32[144,128]{1,0:T(1,128)}', space=vmem, size = 0x12000, scoped, tag = 'internal scratch']
  %s0 = inlined_call_operand.hbm [shape: bf16[16,20], index: 0, kind: input, shape index: {}]
  %s1 = inlined_call_operand.hbm [shape: bf16[20,128], index: 1, kind: input, shape index: {}]
  %s2 = inlined_call_operand.hbm [shape: f32[16,128], index: 2, kind: input, shape index: {}]
  %s3 = inlined_call_operand.vmem [shape: f32[1,128], index: 3, kind: input, shape index: {}]
  %s4 = inlined_call_operand.vmem [shape: f32[2,9,128], index: 4, kind: output, shape index: {}]
  %s5 = sld [smem:[#allocation0]]
  $region38: #{tpu_custom_call.1} parent=0
    _
  %s7 = ssub.s32 1, %s5
  %s8 = scalar_select 0, %s7, %s5
  $region1: #{tpu_custom_call.1} parent=0
    #allocation2 [shape = 'u8[4096]{0}', space=vmem, size = 0x1000, scoped, tag = 'input window, operand 0, single buffered']
    #allocation3 [shape = 's32[1]{0}', space=sflag, size = 0x4, scoped, tag = 'scoped memory for tpu_custom_call.1']
    #allocation4 [shape = 'u8[6144]{0}', space=vmem, size = 0x1800, scoped, tag = 'input window, operand 1, single buffered']
    #allocation5 [shape = 's32[1]{0}', space=sflag, size = 0x4, scoped, tag = 'scoped memory for tpu_custom_call.1']
    #allocation6 [shape = 'u8[8192]{0}', space=vmem, size = 0x2000, scoped, tag = 'input window, operand 2, single buffered']
    %9 = vsyncpa [#allocation3], 0
    %10 = vsyncpa [#allocation5], 0
    // Predicated region
    $region2: #{tpu_custom_call.1} parent=1 // pred_check
      _
    $region3: #{tpu_custom_call.1} parent=1 // pred_check_branch
      %12 = sbr.rel (0) target = $region5
    $region4: #{tpu_custom_call.1} parent=1 // pred_region
      %s14 = ssub.s32 128, 128
      %15 = vsyncadd [#allocation3], %s14
      %s16 = sshll.u32 [#allocation2], 4
      %s17 = int_to_ptr.vmem [resolvable:$true] %s16
      %22 = dma.hbm_to_vmem [thread:$0]  %s0, 128, %s17, [#allocation3], 64, 64, 4
    $region5: #{tpu_custom_call.1} parent=1 // pred_fallthru
      _
    // Predicated region
    $region6: #{tpu_custom_call.1} parent=1 // pred_check
      _
    $region7: #{tpu_custom_call.1} parent=1 // pred_check_branch
      %24 = sbr.rel (0) target = $region9
    $region8: #{tpu_custom_call.1} parent=1 // pred_region
      %s26 = ssub.s32 192, 192
      %27 = vsyncadd [#allocation5], %s26
      %s28 = sshll.u32 [#allocation4], 4
      %s29 = int_to_ptr.vmem [resolvable:$true] %s28
      %34 = dma.hbm_to_vmem [thread:$0]  %s1, 192, %s29, [#allocation5], 64, 64, 4
    $region9: #{tpu_custom_call.1} parent=1 // pred_fallthru
      _
    // Predicated region
    $region10: #{tpu_custom_call.1} parent=1 // pred_check
      _
    $region11: #{tpu_custom_call.1} parent=1 // pred_check_branch
      %36 = sbr.rel (0) target = $region13
    $region12: #{tpu_custom_call.1} parent=1 // pred_region
      %s38 = ssub.s32 256, 256
      %39 = vsyncadd [#allocation5], %s38
      %s40 = sshll.u32 [#allocation6], 4
      %s41 = int_to_ptr.vmem [resolvable:$true] %s40
      %46 = dma.hbm_to_vmem [thread:$0]  %s2, 256, %s41, [#allocation5], 128, 128, 8
    $region13: #{tpu_custom_call.1} parent=1 // pred_fallthru
      _
    // Predicated region
    $region14: #{tpu_custom_call.1} parent=1 // pred_check
      _
    $region15: #{tpu_custom_call.1} parent=1 // pred_check_branch
      %48 = sbr.rel (0) target = $region17
    $region16: #{tpu_custom_call.1} parent=1 // pred_region
      _
    $region17: #{tpu_custom_call.1} parent=1 // pred_fallthru
      _
    // Predicated region
    $region18: #{tpu_custom_call.1} parent=1 // pred_check
      _
    $region19: #{tpu_custom_call.1} parent=1 // pred_check_branch
      %50 = sbr.rel (0) target = $region21
    $region20: #{tpu_custom_call.1} parent=1 // pred_region
      %51 = dma.done [#allocation3], 128
    $region21: #{tpu_custom_call.1} parent=1 // pred_fallthru
      _
    // Predicated region
    $region22: #{tpu_custom_call.1} parent=1 // pred_check
      _
    $region23: #{tpu_custom_call.1} parent=1 // pred_check_branch
      %53 = sbr.rel (0) target = $region25
    $region24: #{tpu_custom_call.1} parent=1 // pred_region
      %54 = dma.done [#allocation5], 192
    $region25: #{tpu_custom_call.1} parent=1 // pred_fallthru
      _
    // Predicated region
    $region26: #{tpu_custom_call.1} parent=1 // pred_check
      _
    $region27: #{tpu_custom_call.1} parent=1 // pred_check_branch
      %56 = sbr.rel (0) target = $region29
    $region28: #{tpu_custom_call.1} parent=1 // pred_region
      %57 = dma.done [#allocation5], 256
    $region29: #{tpu_custom_call.1} parent=1 // pred_fallthru
      _
    %v59 = vld [vmem:[#allocation2] sm:$0xf]
    %v60 = vld [vmem:[#allocation2 + $0x4] sm:$0xf]
    %v61 = vld [vmem:[#allocation4] sm:$0xf]
    %v62 = vld [vmem:[#allocation4 + $0x4] sm:$0xf]
    %v63 = vld [vmem:[#allocation4 + $0x8] sm:$0x3]
    %v64 = vld [vmem:[#allocation6] sm:$0xff]
    %v65 = vld [vmem:[#allocation6 + $0x8] sm:$0xff]
    %v68 = vunpack.c.l.b16 %v59
    %v69 = vunpack.c.l.b16 %v60
    %v70 = vpack.c.b16 %v69, %v68
    %v74 = vunpack.c.l.b16 %v61
    %v75 = vunpack.c.l.b16 %v62
    %v76 = vunpack.c.l.b16 %v63
    %v77 = vpack.c.b16 %v75, %v74
    %v78 = vpack.c.b16 %v76, %v76
    %vm80 = vcmask 162816
    %v82 = vsel %vm80, %v70, 0
    %vm84 = vcmask 1041408
    %v86 = vsel %vm84, %v78, 0
    %88 = vmatprep.subr.bf16.mxu0 0
    %89 = vmatpush1.bf16.msra.mxu0 0
    %90 = vmatprep.subr.bf16.mxu0 0
    %91 = vmatpush1.bf16.msra.mxu0 0
    %92 = vmatprep.subr.bf16.mxu0 0
    %93 = vmatpush1.bf16.msra.mxu0 0
    %94 = vmatprep.subr.bf16.mxu0 0
    %95 = vmatpush1.bf16.msra.mxu0 0
    %96 = vmatprep.subr.bf16.mxu0 0
    %97 = vmatpush1.bf16.msra.mxu0 0
    %98 = vmatprep.subr.bf16.mxu0 0
    %99 = vmatpush1.bf16.msra.mxu0 0
    %100 = vmatprep.subr.bf16.mxu0 0
    %101 = vmatpush1.bf16.msra.mxu0 %v86
    %102 = vmatprep.subr.bf16.mxu0 0
    %103 = vmatpush1.bf16.msra.mxu0 %v77
    %104 = vmatprep.subr.bf16.mxu0 0
    %105 = vmatpush2.bf16.msra.mxu0 0
    %106 = vmatprep.subr.bf16.mxu0 0
    %107 = vmatpush2.bf16.msra.mxu0 0
    %108 = vmatprep.subr.bf16.mxu0 0
    %109 = vmatpush2.bf16.msra.mxu0 0
    %110 = vmatprep.subr.bf16.mxu0 0
    %111 = vmatpush2.bf16.msra.mxu0 0
    %112 = vmatprep.subr.bf16.mxu0 0
    %113 = vmatpush2.bf16.msra.mxu0 0
    %114 = vmatprep.subr.bf16.mxu0 0
    %115 = vmatpush2.bf16.msra.mxu0 0
    %116 = vmatprep.subr.bf16.mxu0 0
    %117 = vmatpush2.bf16.msra.mxu0 0
    %118 = vmatprep.subr.bf16.mxu0 0
    %119 = vmatpush2.bf16.msra.mxu0 0
    %120 = vmatprep.mubr.bf16.mxu0 0
    %121 = vmatmul.mubr.bf16.gmra.mxu0 %v82
    %v122 = vpop.f32.mrf.mxu0
    %v123 = vadd.f32 %v64, %v122
    %v124 = vpop.f32.mrf.mxu0
    %v125 = vpop.f32.mrf.mxu0
    %v126 = vadd.f32 %v65, %v125
    %v127 = vpop.f32.mrf.mxu0
    %128 = vdwg.mxu0
    %v129 = vld [vmem:[%s3] sm:$0x1]
    %v131 = vrot.slane %v123, 7
    %vm133 = vcmask 1040384
    %v134 = vsel %vm133, %v129, %v131
    %135 = vst [vmem:[%s4] sm:$0xff] %v134
    %136 = vst [vmem:[%s4 + $0x8] sm:$0x1] %v131
    %v138 = vrot.slane %v126, 7
    %v140 = vsel %vm133, %v129, %v138
    %s141 = scalar_lea.vmem %s4, 16
    %142 = vst [vmem:[%s141] sm:$0xff] %v140
    %143 = vst [vmem:[%s141 + $0x8] sm:$0x1] %v138
    // Predicated region
    $region30: #{tpu_custom_call.1} parent=1 // pred_check
      _
    $region31: #{tpu_custom_call.1} parent=1 // pred_check_branch
      %145 = sbr.rel (0) target = $region33
    $region32: #{tpu_custom_call.1} parent=1 // pred_region
      _
    $region33: #{tpu_custom_call.1} parent=1 // pred_fallthru
      _
    // Predicated region
    $region34: #{tpu_custom_call.1} parent=1 // pred_check
      _
    $region35: #{tpu_custom_call.1} parent=1 // pred_check_branch
      %147 = sbr.rel (0) target = $region37
    $region36: #{tpu_custom_call.1} parent=1 // pred_region
      _
    $region37: #{tpu_custom_call.1} parent=1 // pred_fallthru
      _
    %148 = vsyncpa [#allocation3], 1
    %149 = vsyncpa [#allocation5], 1

</llo_original>
